<compile_context>
chip_gen: v6e
topology: v6e:2x2x1
jax: 0.10.0
libtpu: 0.0.40
codegen_flags: <defaults>
</compile_context>

<pallas_src>
import math
import functools

import jax
import jax.numpy as jnp
from jax.experimental import pallas as pl
from jax.experimental.pallas import tpu as pltpu


def _make_pe(max_len: int, d_model: int) -> jnp.ndarray:
    """Deterministic sinusoidal positional-encoding table [max_len, d_model]."""
    position = jnp.arange(max_len, dtype=jnp.float32)[:, None]              # (L, 1)
    div_term = jnp.exp(
        jnp.arange(0, d_model, 2, dtype=jnp.float32) * (-math.log(10000.0) / d_model)
    )                                                                        # (D/2,)
    angles = position * div_term                                             # (L, D/2)
    pe = jnp.zeros((max_len, d_model), dtype=jnp.float32)
    pe = pe.at[:, 0::2].set(jnp.sin(angles))
    pe = pe.at[:, 1::2].set(jnp.cos(angles))
    return pe


def _hash_keep_mask(shape, row_offset_u32, seed_u32, p: float):
    """Counter-based hash -> boolean keep mask with P(keep) ~= 1 - p.

    Pure integer VPU ops (mul/xor/shift), so it lowers on TPU and in interpret
    mode alike, and moves zero extra bytes from HBM.
    """
    tS, B, D = shape
    r = jax.lax.broadcasted_iota(jnp.int32, shape, 0).astype(jnp.uint32) + row_offset_u32
    b = jax.lax.broadcasted_iota(jnp.int32, shape, 1).astype(jnp.uint32)
    d = jax.lax.broadcasted_iota(jnp.int32, shape, 2).astype(jnp.uint32)
    idx = r * jnp.uint32(B * D) + b * jnp.uint32(D) + d   # globally unique counter
    h = idx ^ seed_u32
    h = h * jnp.uint32(0x9E3779B1)
    h = h ^ (h >> jnp.uint32(15))
    h = h * jnp.uint32(0x85EBCA77)
    h = h ^ (h >> jnp.uint32(13))
    h = h * jnp.uint32(0xC2B2AE3D)
    h = h ^ (h >> jnp.uint32(16))
    # Integer-threshold compare: keep iff h >= round(p * 2^32).
    threshold = jnp.uint32(min(int(round(p * 2.0 ** 32)), 2 ** 32 - 1))
    return h >= threshold


def _pe_dropout_kernel(seed_ref, x_ref, pe_ref, o_ref, *, p: float):
    # x_ref: (tS, B, D) tile; pe_ref: (tS, D) tile of the PE table.
    x = x_ref[...].astype(jnp.float32)
    pe = pe_ref[...]
    # pe broadcast over the batch (sublane) axis.  Kept in-kernel: the
    # alternative (wrapper transpose to [B,S,D]) would cost two extra full
    # HBM passes on a purely bandwidth-bound op.
    y = x + pe[:, None, :]

    if p > 0.0:
        tS = x_ref.shape[0]
        seed_u32 = seed_ref[0].astype(jnp.uint32)
        # Mix the grid position into the counter so every tile gets a
        # different mask (correctness requirement for the tiled version).
        row_offset = (pl.program_id(0) * tS).astype(jnp.uint32)
        keep = _hash_keep_mask(x_ref.shape, row_offset, seed_u32, p)
        scale = jnp.float32(1.0 / (1.0 - p))
        y = jnp.where(keep, y * scale, jnp.zeros_like(y))

    o_ref[...] = y.astype(o_ref.dtype)   # cast only at the store


def positional_encoding(x: jnp.ndarray,
                        pe_table: jnp.ndarray,
                        *,
                        p: float = 0.1,
                        training: bool = True,
                        seed: int = 0,
                        tile_s: int | None = None) -> jnp.ndarray:
    """x: [seq_len, batch, d_model]; pe_table: [max_len, d_model]."""
    S, B, D = x.shape
    pe = pe_table[:S].astype(jnp.float32)                 # (S, D)

    if not training:
        # Dropout is identity in eval mode: a plain fused broadcast-add already
        # hits the HBM roofline; skip the custom-call overhead entirely.
        return (x.astype(jnp.float32) + pe[:, None, :]).astype(x.dtype)

    # Tile the sequence axis.  Target ~4 MiB per x tile so the double-buffered
    # in/out blocks (+ the small pe block) stay well under the 32 MiB scoped
    # VMEM default that also holds on v7x (64 MiB physical per TensorCore).
    itemsize = jnp.dtype(x.dtype).itemsize
    if tile_s is None:
        target_bytes = 4 * 1024 * 1024
        tile_s = max(1, target_bytes // max(1, B * D * itemsize))
    tile_s = min(int(tile_s), S)
    if tile_s < S:
        tile_s = max(8, (tile_s // 8) * 8)   # keep the pe block sublane-aligned
    grid_s = pl.cdiv(S, tile_s)

    seed_arr = jnp.array([seed], dtype=jnp.int32)
    kernel = functools.partial(_pe_dropout_kernel, p=float(p))

    return pl.pallas_call(
        kernel,
        out_shape=jax.ShapeDtypeStruct((S, B, D), x.dtype),
        grid_spec=pltpu.PrefetchScalarGridSpec(
            num_scalar_prefetch=1,
            grid=(grid_s,),
            in_specs=[
                pl.BlockSpec((tile_s, B, D), lambda i, seed: (i, 0, 0)),
                pl.BlockSpec((tile_s, D), lambda i, seed: (i, 0)),
            ],
            out_specs=pl.BlockSpec((tile_s, B, D), lambda i, seed: (i, 0, 0)),
        ),
        compiler_params=pltpu.CompilerParams(
            dimension_semantics=("parallel",)),   # no reduction; megacore-friendly
    )(seed_arr, x, pe)


if __name__ == "__main__":
    # Small shapes implied by forward(): x is [seq_len, batch, d_model].
    seq_len, batch, d_model = 8, 2, 32
    max_len = 64
    dropout_p = 0.1

    key = jax.random.PRNGKey(0)
    x = jax.random.normal(key, (seq_len, batch, d_model), dtype=jnp.float32)
    pe_table = _make_pe(max_len, d_model)
    ref = x + pe_table[:seq_len][:, None, :]

    # 1) Kernel path with dropout disabled (p=0): must match the reference.
    out_nodrop = jax.block_until_ready(
        positional_encoding(x, pe_table, p=0.0, training=True))
    assert jnp.allclose(out_nodrop, ref, atol=1e-6), "p=0 kernel mismatch"

    # 2) Eval mode (dropout is identity): short-circuit path matches reference.
    out_eval = jax.block_until_ready(
        positional_encoding(x, pe_table, p=dropout_p, training=False))
    assert jnp.allclose(out_eval, ref, atol=1e-6), "eval-mode mismatch"

    # 3) Training mode: surviving elements equal ref / (1-p), dropped are 0.
    out_train = jax.block_until_ready(
        positional_encoding(x, pe_table, p=dropout_p, training=True, seed=123))
    scaled_ref = ref / (1.0 - dropout_p)
    structural_ok = jnp.all(
        jnp.isclose(out_train, scaled_ref, atol=1e-5) | (out_train == 0.0))
    assert bool(structural_ok), "training-mode dropout mismatch"
    drop_frac = float(jnp.mean((out_train == 0.0).astype(jnp.float32)))
    assert 0.0 < drop_frac < 0.5, f"implausible dropout fraction {drop_frac}"

    print("KERNEL_OK")
</pallas_src>

<mosaic_0001>
module attributes {stable_mosaic.version = 11 : i64} {
  func.func @_pe_dropout_kernel(%arg0: i32, %arg1: memref<1xi32, #tpu.memory_space<smem>>, %arg2: memref<8x2x32xf32, #tpu.memory_space<vmem>>, %arg3: memref<8x32xf32, #tpu.memory_space<vmem>>, %arg4: memref<8x2x32xf32, #tpu.memory_space<vmem>>) attributes {dimension_semantics = [#tpu.dimension_semantics<parallel>], iteration_bounds = array<i64: 1>, scalar_prefetch = 1 : i64, scratch_operands = 0 : i64, tpu.core_type = #tpu.core_type<tc>, window_params = [{transform_indices = @transform_0, window_bounds = array<i64: 8, 2, 32>}, {transform_indices = @transform_1, window_bounds = array<i64: 8, 32>}, {transform_indices = @transform_2, window_bounds = array<i64: 8, 2, 32>}]} {
    %c0 = arith.constant 0 : index
    %c0_0 = arith.constant 0 : index
    %c0_1 = arith.constant 0 : index
    %0 = vector.load %arg2[%c0, %c0_0, %c0_1] : memref<8x2x32xf32, #tpu.memory_space<vmem>>, vector<8x2x32xf32>
    %c0_2 = arith.constant 0 : index
    %c0_3 = arith.constant 0 : index
    %1 = vector.load %arg3[%c0_2, %c0_3] : memref<8x32xf32, #tpu.memory_space<vmem>>, vector<8x32xf32>
    %2 = vector.shape_cast %1 : vector<8x32xf32> to vector<8x1x32xf32>
    %3 = vector.broadcast %2 : vector<8x1x32xf32> to vector<8x2x32xf32>
    %4 = arith.addf %0, %3 : vector<8x2x32xf32>
    %c0_4 = arith.constant 0 : index
    %c0_5 = arith.constant 0 : index
    %c0_6 = arith.constant 0 : index
    %5 = vector.load %arg4[%c0_4, %c0_5, %c0_6] : memref<8x2x32xf32, #tpu.memory_space<vmem>>, vector<8x2x32xf32>
    tpu.vector_store %arg4[%c0_4, %c0_5, %c0_6], %4 {strides = array<i32>} : memref<8x2x32xf32, #tpu.memory_space<vmem>>, vector<8x2x32xf32>,
    return
  }
  func.func @transform_0(%arg0: i32, %arg1: memref<1xi32, #tpu.memory_space<smem>>) -> (i32, i32, i32) {
    %c0_i32 = arith.constant 0 : i32
    %c0_i32_0 = arith.constant 0 : i32
    %c0_i32_1 = arith.constant 0 : i32
    return %arg0, %c0_i32, %c0_i32_0 : i32, i32, i32
  }
  func.func @transform_1(%arg0: i32, %arg1: memref<1xi32, #tpu.memory_space<smem>>) -> (i32, i32) {
    %c0_i32 = arith.constant 0 : i32
    %c0_i32_0 = arith.constant 0 : i32
    return %arg0, %c0_i32 : i32, i32
  }
  func.func @transform_2(%arg0: i32, %arg1: memref<1xi32, #tpu.memory_space<smem>>) -> (i32, i32, i32) {
    %c0_i32 = arith.constant 0 : i32
    %c0_i32_0 = arith.constant 0 : i32
    %c0_i32_1 = arith.constant 0 : i32
    return %arg0, %c0_i32, %c0_i32_0 : i32, i32, i32
  }
}

</mosaic_0001>

<llo_original>
// kernel: tpu_custom_call.1
$region0: #{tpu_custom_call.1}
  #allocation0 [shape = 'u32[]', space=smem, size = 0x4, offset = 0x4, fixed_abs, tag = 'smem constant byte address 0x4 - core index']
  #allocation1 [shape = 'u32[144,128]{1,0:T(1,128)}', space=vmem, size = 0x12000, scoped, tag = 'internal scratch']
  #allocation2 [shape = 's32[1]{0}', space=sflag, size = 0x4, scoped, tag = 'scoped memory for tpu_custom_call.1']
  #allocation3 [shape = 's32[1]{0:T(128)S(6)}', space=smem, size = 0x200, scoped, tag = 'prefetched SMEM operand 0']
  %s0 = inlined_call_operand.<no memory space> [shape: s32[1], index: 0, kind: input, shape index: {}]
  %s1 = inlined_call_operand.hbm [shape: f32[8,2,32], index: 1, kind: input, shape index: {}]
  %s2 = inlined_call_operand.hbm [shape: f32[8,32], index: 2, kind: input, shape index: {}]
  %s3 = inlined_call_operand.hbm [shape: f32[8,2,32], index: 3, kind: output, shape index: {}]
  %s4 = sld [smem:[#allocation0]]
  $region26: #{tpu_custom_call.1} parent=0
    _
  %s6 = ssub.s32 1, %s4
  %s7 = scalar_select 0, %s6, %s4
  %8 = sst [smem:[#allocation3]] %s0
  $region1: #{tpu_custom_call.1} parent=0
    #allocation4 [shape = 'u8[8192]{0}', space=vmem, size = 0x2000, scoped, tag = 'input window, operand 1, single buffered']
    #allocation5 [shape = 's32[1]{0}', space=sflag, size = 0x4, scoped, tag = 'scoped memory for tpu_custom_call.1']
    #allocation6 [shape = 's32[1]{0}', space=sflag, size = 0x4, scoped, tag = 'scoped memory for tpu_custom_call.1']
    #allocation7 [shape = 'u8[4096]{0}', space=vmem, size = 0x1000, scoped, tag = 'input window, operand 2, single buffered']
    #allocation8 [shape = 's32[1]{0}', space=sflag, size = 0x4, scoped, tag = 'scoped memory for tpu_custom_call.1']
    #allocation9 [shape = 'u8[8192]{0}', space=vmem, size = 0x2000, scoped, tag = 'output window, operand 0, single buffered']
    %9 = vsyncpa [#allocation5], 0
    %10 = vsyncpa [#allocation8], 0
    %11 = vsyncpa [#allocation6], 0
    // Predicated region
    $region2: #{tpu_custom_call.1} parent=1 // pred_check
      _
    $region3: #{tpu_custom_call.1} parent=1 // pred_check_branch
      %13 = sbr.rel (0) target = $region5
    $region4: #{tpu_custom_call.1} parent=1 // pred_region
      %s15 = ssub.s32 256, 256
      %16 = vsyncadd [#allocation5], %s15
      %s17 = sshll.u32 [#allocation4], 4
      %s18 = int_to_ptr.vmem [resolvable:$true] %s17
      %23 = dma.hbm_to_vmem [thread:$0]  %s1, 256, %s18, [#allocation5], 32, 32, 2
    $region5: #{tpu_custom_call.1} parent=1 // pred_fallthru
      _
    // Predicated region
    $region6: #{tpu_custom_call.1} parent=1 // pred_check
      _
    $region7: #{tpu_custom_call.1} parent=1 // pred_check_branch
      %25 = sbr.rel (0) target = $region9
    $region8: #{tpu_custom_call.1} parent=1 // pred_region
      %s27 = ssub.s32 128, 128
      %28 = vsyncadd [#allocation8], %s27
      %s30 = sshll.u32 [#allocation7], 4
      %s31 = int_to_ptr.vmem [resolvable:$true] %s30
      %33 = dma.hbm_to_vmem [thread:$0]  %s2, 128, %s31, [#allocation8]
    $region9: #{tpu_custom_call.1} parent=1 // pred_fallthru
      _
    // Predicated region
    $region10: #{tpu_custom_call.1} parent=1 // pred_check
      _
    $region11: #{tpu_custom_call.1} parent=1 // pred_check_branch
      %35 = sbr.rel (0) target = $region13
    $region12: #{tpu_custom_call.1} parent=1 // pred_region
      %36 = dma.done [#allocation5], 256
    $region13: #{tpu_custom_call.1} parent=1 // pred_fallthru
      _
    // Predicated region
    $region14: #{tpu_custom_call.1} parent=1 // pred_check
      _
    $region15: #{tpu_custom_call.1} parent=1 // pred_check_branch
      %38 = sbr.rel (0) target = $region17
    $region16: #{tpu_custom_call.1} parent=1 // pred_region
      %39 = dma.done [#allocation8], 128
    $region17: #{tpu_custom_call.1} parent=1 // pred_fallthru
      _
    %v40 = vld [vmem:[#allocation4] sm:$0x3]
    %v41 = vld [vmem:[#allocation4 + $0x2] sm:$0x3]
    %v42 = vld [vmem:[#allocation4 + $0x4] sm:$0x3]
    %v43 = vld [vmem:[#allocation4 + $0x6] sm:$0x3]
    %v44 = vld [vmem:[#allocation4 + $0x8] sm:$0x3]
    %v45 = vld [vmem:[#allocation4 + $0xa] sm:$0x3]
    %v46 = vld [vmem:[#allocation4 + $0xc] sm:$0x3]
    %v47 = vld [vmem:[#allocation4 + $0xe] sm:$0x3]
    %v48 = vld [vmem:[#allocation7] sm:$0xff]
    %v50 = vcombine.high %v48, %v48
    %v52 = vunpack.c.l.s4 1966171168
    %v53 = vunpack.c.0.s8 %v52
    %v54 = vlaneseq
    %v55 = vshrl.u32 %v54, 7
    %v56 = vsub.s32 %v53, %v55
    %v57 = vrot.slane %v48, %v56
    %v59 = vunpack.c.l.s4 1966171168
    %v60 = vunpack.c.0.s8 %v59
    %v61 = vlaneseq
    %v62 = vshrl.u32 %v61, 7
    %v63 = vsub.s32 %v60, %v62
    %v64 = vrot.slane %v50, %v63
    %v65 = vcombine.high %v57, %v57
    %v66 = vcombine.high %v64, %v64
    %v68 = vunpack.c.l.s4 1966171168
    %v69 = vunpack.c.0.s8 %v68
    %v70 = vlaneseq
    %v71 = vshrl.u32 %v70, 7
    %v72 = vsub.s32 %v69, %v71
    %v73 = vrot.slane %v57, %v72
    %v75 = vunpack.c.l.s4 1966171168
    %v76 = vunpack.c.0.s8 %v75
    %v77 = vlaneseq
    %v78 = vshrl.u32 %v77, 7
    %v79 = vsub.s32 %v76, %v78
    %v80 = vrot.slane %v64, %v79
    %v82 = vunpack.c.l.s4 1966171168
    %v83 = vunpack.c.0.s8 %v82
    %v84 = vlaneseq
    %v85 = vshrl.u32 %v84, 7
    %v86 = vsub.s32 %v83, %v85
    %v87 = vrot.slane %v65, %v86
    %v89 = vunpack.c.l.s4 1966171168
    %v90 = vunpack.c.0.s8 %v89
    %v91 = vlaneseq
    %v92 = vshrl.u32 %v91, 7
    %v93 = vsub.s32 %v90, %v92
    %v94 = vrot.slane %v66, %v93
    %v95 = vcombine.high %v73, %v73
    %v96 = vcombine.high %v80, %v80
    %v97 = vcombine.high %v87, %v87
    %v98 = vcombine.high %v94, %v94
    %v99 = vlaneseq
    %v100 = vshrl.u32 %v99, 7
    %v101 = vsub.s32 0, %v100
    %v102 = vrot.slane %v73, %v101
    %v103 = vlaneseq
    %v104 = vshrl.u32 %v103, 7
    %v105 = vsub.s32 0, %v104
    %v106 = vrot.slane %v87, %v105
    %v107 = vlaneseq
    %v108 = vshrl.u32 %v107, 7
    %v109 = vsub.s32 0, %v108
    %v110 = vrot.slane %v95, %v109
    %v111 = vlaneseq
    %v112 = vshrl.u32 %v111, 7
    %v113 = vsub.s32 0, %v112
    %v114 = vrot.slane %v97, %v113
    %v115 = vlaneseq
    %v116 = vshrl.u32 %v115, 7
    %v117 = vsub.s32 0, %v116
    %v118 = vrot.slane %v80, %v117
    %v119 = vlaneseq
    %v120 = vshrl.u32 %v119, 7
    %v121 = vsub.s32 0, %v120
    %v122 = vrot.slane %v94, %v121
    %v123 = vlaneseq
    %v124 = vshrl.u32 %v123, 7
    %v125 = vsub.s32 0, %v124
    %v126 = vrot.slane %v96, %v125
    %v127 = vlaneseq
    %v128 = vshrl.u32 %v127, 7
    %v129 = vsub.s32 0, %v128
    %v130 = vrot.slane %v98, %v129
    %v139 = vadd.f32 %v40, %v102
    %v140 = vadd.f32 %v41, %v106
    %v141 = vadd.f32 %v42, %v110
    %v142 = vadd.f32 %v43, %v114
    %v143 = vadd.f32 %v44, %v118
    %v144 = vadd.f32 %v45, %v122
    %v145 = vadd.f32 %v46, %v126
    %v146 = vadd.f32 %v47, %v130
    %vm147 = vcmask 254976
    %148 = vst.msk [vmem:[#allocation9] sm:$0x3] %vm147, %v139
    %149 = vst.msk [vmem:[#allocation9 + $0x2] sm:$0x3] %vm147, %v140
    %150 = vst.msk [vmem:[#allocation9 + $0x4] sm:$0x3] %vm147, %v141
    %151 = vst.msk [vmem:[#allocation9 + $0x6] sm:$0x3] %vm147, %v142
    %152 = vst.msk [vmem:[#allocation9 + $0x8] sm:$0x3] %vm147, %v143
    %153 = vst.msk [vmem:[#allocation9 + $0xa] sm:$0x3] %vm147, %v144
    %154 = vst.msk [vmem:[#allocation9 + $0xc] sm:$0x3] %vm147, %v145
    %155 = vst.msk [vmem:[#allocation9 + $0xe] sm:$0x3] %vm147, %v146
    // Predicated region
    $region18: #{tpu_custom_call.1} parent=1 // pred_check
      _
    $region19: #{tpu_custom_call.1} parent=1 // pred_check_branch
      %157 = sbr.rel (0) target = $region21
    $region20: #{tpu_custom_call.1} parent=1 // pred_region
      %s159 = ssub.s32 256, 256
      %160 = vsyncadd [#allocation6], %s159
      %s161 = sshll.u32 [#allocation9], 4
      %s162 = int_to_ptr.vmem [resolvable:$true] %s161
      %167 = dma.vmem_to_hbm [thread:$0]  %s162, 256, %s3, [#allocation6], 32, 32, 2
    $region21: #{tpu_custom_call.1} parent=1 // pred_fallthru
      _
    // Predicated region
    $region22: #{tpu_custom_call.1} parent=1 // pred_check
      _
    $region23: #{tpu_custom_call.1} parent=1 // pred_check_branch
      %169 = sbr.rel (0) target = $region25
    $region24: #{tpu_custom_call.1} parent=1 // pred_region
      %170 = dma.done [#allocation6], 256
    $region25: #{tpu_custom_call.1} parent=1 // pred_fallthru
      _
    %171 = vsyncpa [#allocation5], 1
    %172 = vsyncpa [#allocation8], 1
    %173 = vsyncpa [#allocation6], 1

</llo_original>
